<compile_context>
chip_gen: v7x
topology: tpu7x:2x2x1
jax: 0.10.0
libtpu: 0.0.40
codegen_flags: <defaults>
</compile_context>

<pallas_src>
import functools

import jax
import jax.numpy as jnp
from jax.experimental import pallas as pl
from jax.experimental.pallas import tpu as pltpu


_LANE = 128


def _sublane_multiple(dtype):
    itemsize = jnp.dtype(dtype).itemsize
    return max(8, 32 // max(itemsize, 1))  # f32 -> 8, bf16 -> 16, int8/fp8 -> 32


def _vmem_capacity_bytes():
    try:
        return int(pltpu.get_tpu_info().vmem_capacity_bytes)
    except Exception:
        return 64 * 1024 * 1024  # conservative default (v7x-sized VMEM)


def _choose_layout(H, W):
    """Re-view the contiguous H*W spatial block as (R, Wc) with lane-dense Wc."""
    L = H * W
    if W % _LANE == 0:
        return H, W
    for wc in (512, 384, 256, 128):
        if L % wc == 0:
            return L // wc, wc
    # No 128-multiple factorization: put everything on the lane axis for small
    # shapes, otherwise keep the native (H, W) layout.
    if L <= 65536:
        return 1, L
    return H, W


def _choose_row_tile(R, rows_budget, sub_mult):
    """Largest row tile under budget, preferring exact divisors of R (no mask)."""
    if R <= rows_budget:
        return R, False
    start = max(sub_mult, (rows_budget // sub_mult) * sub_mult)
    for tr in range(start, 0, -sub_mult):
        if R % tr == 0:
            return tr, False
    return start, True


@functools.partial(jax.jit, static_argnames=("row_tile",))
def iou_loss(result, target, *, row_tile=None):
    """result: (N, 2, H, W) logits (f32 or bf16); target: (N, 1, H, W) mask."""
    N, C, H, W = result.shape
    assert C == 2, "IOU_loss expects 2 logit channels (binary segmentation)"
    assert target.shape == (N, 1, H, W)

    # Free re-views of the contiguous NCHW buffers (no HBM round trip).
    R, Wc = _choose_layout(H, W)
    res = result.reshape(N, 2, R, Wc)
    tgt = target.reshape(N, R, Wc)

    sub_mult = max(_sublane_multiple(result.dtype), _sublane_multiple(target.dtype))

    # Generation-aware stage budget / VMEM cap.
    cap = _vmem_capacity_bytes()
    if cap >= 96 * 1024 * 1024:   # v5e / v6e (128 MiB VMEM)
        stage_budget, vmem_limit = 16 * 1024 * 1024, 96 * 1024 * 1024
    else:                         # v7x (64 MiB VMEM) or unknown
        stage_budget, vmem_limit = 10 * 1024 * 1024, 48 * 1024 * 1024

    per_row_bytes = Wc * (2 * jnp.dtype(result.dtype).itemsize
                          + jnp.dtype(target.dtype).itemsize)
    rows_budget = max(sub_mult, stage_budget // max(per_row_bytes, 1))

    if row_tile is None:
        TR, needs_mask = _choose_row_tile(R, rows_budget, sub_mult)
    else:
        TR = int(row_tile)
        assert TR == R or (TR % sub_mult == 0 and TR <= R), (
            f"row_tile must equal the flattened row count ({R}) or be a "
            f"multiple of {sub_mult}")
        needs_mask = (R % TR) != 0

    n_r = pl.cdiv(R, TR)
    tail = R - (n_r - 1) * TR          # valid rows in the last tile
    SUB = 8 if TR % 8 == 0 else 1      # sublane extent of the partial accumulators
    total = float(N * H * W)           # elements per channel

    def kernel(r_ref, t_ref, out_ref):
        r_i = pl.program_id(1)

        @pl.when(r_i == 0)
        def _init():
            out_ref[...] = jnp.zeros_like(out_ref)

        # Softmax over 2 channels == sigmoid(logit difference); subtract in the
        # input dtype, widen once, keep the transcendental on the EUP.
        d = (r_ref[0] - r_ref[1]).astype(jnp.float32)
        p0 = jax.nn.sigmoid(d)                      # channel-0 prob; p1 = 1 - p0
        t = t_ref[...].astype(jnp.float32)

        def tile_partial(x):  # (TR, Wc) f32 -> (SUB, Wc)
            if SUB == 8:
                # Pure VPU adds of 8-sublane strips; no cross-sublane reduce.
                acc = x[0:8, :]
                for i in range(1, TR // 8):
                    acc = acc + x[8 * i:8 * (i + 1), :]
                return acc
            return jnp.sum(x, axis=0, keepdims=True)   # single small tile only

        def accumulate(p0v, tv):
            out_ref[0 * SUB:1 * SUB, :] += tile_partial(p0v)
            out_ref[1 * SUB:2 * SUB, :] += tile_partial(tv)
            out_ref[2 * SUB:3 * SUB, :] += tile_partial(p0v * tv)

        if needs_mask:
            # Only the last tile is ragged: build the mask only there.
            @pl.when(r_i != n_r - 1)
            def _full():
                accumulate(p0, t)

            @pl.when(r_i == n_r - 1)
            def _ragged():
                rows = jax.lax.broadcasted_iota(jnp.int32, (TR, Wc), 0)
                valid = rows < tail
                accumulate(jnp.where(valid, p0, 0.0), jnp.where(valid, t, 0.0))
        else:
            accumulate(p0, t)

    partials = pl.pallas_call(
        kernel,
        out_shape=jax.ShapeDtypeStruct((N, 3 * SUB, Wc), jnp.float32),
        grid=(N, n_r),
        in_specs=[
            # Both channels of one row-tile of one image (strided channel DMA).
            pl.BlockSpec((None, 2, TR, Wc), lambda n, r: (n, 0, r, 0)),
            pl.BlockSpec((None, TR, Wc), lambda n, r: (n, r, 0)),
        ],
        # Per-image accumulator block, resident across the (arbitrary) row axis.
        out_specs=pl.BlockSpec((None, 3 * SUB, Wc), lambda n, r: (n, 0, 0)),
        compiler_params=pltpu.CompilerParams(
            dimension_semantics=("parallel", "arbitrary"),
            vmem_limit_bytes=vmem_limit,
        ),
    )(res, tgt)

    # Tiny scalar epilogue in plain JAX (keeps the grid's N axis parallel).
    sums = jnp.sum(partials.reshape(N, 3, SUB, Wc), axis=(0, 2, 3))  # (3,)
    s_p0, s_t, s_pt = sums[0], sums[1], sums[2]
    # channel 0: soft=p0, onehot=1-t ;  channel 1: soft=1-p0, onehot=t
    tp0, den0 = s_p0 - s_pt, total - s_t + s_pt    # tp / (tp + fn + fp)
    tp1, den1 = s_t - s_pt, total - s_p0 + s_pt
    miou = 0.5 * (tp0 / den0 + tp1 / den1)
    return -jnp.log(miou)


def _iou_loss_ref(result, target):
    """Pure-JAX reference mirroring the PyTorch module."""
    soft = jax.nn.softmax(result, axis=1)
    onehot = jnp.concatenate((1.0 - target, target), axis=1)
    tp = jnp.sum(soft * onehot, axis=(0, 2, 3))
    fn = jnp.sum(soft * (1.0 - onehot), axis=(0, 2, 3))
    fp = jnp.sum((1.0 - soft) * onehot, axis=(0, 2, 3))
    iou = tp / (tp + fn + fp)
    return -jnp.log(jnp.mean(iou))


if __name__ == "__main__":
    key = jax.random.PRNGKey(0)
    k1, k2, k3, k4, k5, k6 = jax.random.split(key, 6)

    # Test 1: small odd-W shape -> lane-dense flattened layout, single tile.
    N, C, H, W = 2, 2, 16, 16
    result = jax.random.normal(k1, (N, C, H, W), dtype=jnp.float32)
    target = (jax.random.uniform(k2, (N, 1, H, W)) > 0.5).astype(jnp.float32)
    loss = jax.block_until_ready(iou_loss(result, target))
    ref = _iou_loss_ref(result, target)
    assert jnp.allclose(loss, ref, atol=1e-4, rtol=1e-4), (loss, ref)

    # Test 2: multi-tile grid with a ragged last row-tile (mask-on-last-tile path).
    N2, H2, W2 = 2, 44, 128
    result2 = jax.random.normal(k3, (N2, 2, H2, W2), dtype=jnp.float32)
    target2 = (jax.random.uniform(k4, (N2, 1, H2, W2)) > 0.5).astype(jnp.float32)
    loss2 = jax.block_until_ready(iou_loss(result2, target2, row_tile=8))
    ref2 = _iou_loss_ref(result2, target2)
    assert jnp.allclose(loss2, ref2, atol=1e-4, rtol=1e-4), (loss2, ref2)

    # Test 3: native bf16 inputs (halved HBM traffic path).
    N3, H3, W3 = 2, 32, 32
    result3 = jax.random.normal(k5, (N3, 2, H3, W3), dtype=jnp.bfloat16)
    target3 = (jax.random.uniform(k6, (N3, 1, H3, W3)) > 0.5).astype(jnp.bfloat16)
    loss3 = jax.block_until_ready(iou_loss(result3, target3))
    ref3 = _iou_loss_ref(result3.astype(jnp.float32), target3.astype(jnp.float32))
    assert jnp.allclose(loss3, ref3, atol=1e-2, rtol=1e-2), (loss3, ref3)

    print("KERNEL_OK")
</pallas_src>

<mosaic_0001>
module attributes {stable_mosaic.version = 11 : i64} {
  func.func @kernel(%arg0: i32, %arg1: i32, %arg2: memref<1x2x1x256xf32, #tpu.memory_space<vmem>>, %arg3: memref<1x1x256xf32, #tpu.memory_space<vmem>>, %arg4: memref<1x3x256xf32, #tpu.memory_space<vmem>>) attributes {dimension_semantics = [#tpu.dimension_semantics<parallel>, #tpu.dimension_semantics<arbitrary>], iteration_bounds = array<i64: 2, 1>, scalar_prefetch = 0 : i64, scratch_operands = 0 : i64, tpu.core_type = #tpu.core_type<tc>, window_params = [{transform_indices = @transform_0, window_bounds = array<i64: 1, 2, 1, 256>}, {transform_indices = @transform_1, window_bounds = array<i64: 1, 1, 256>}, {transform_indices = @transform_2, window_bounds = array<i64: 1, 3, 256>}]} {
    %c0_i32 = arith.constant 0 : i32
    %0 = arith.cmpi eq, %arg1, %c0_i32 : i32
    %1 = arith.extui %0 : i1 to i32
    %c0_i32_0 = arith.constant 0 : i32
    %2 = arith.cmpi ne, %1, %c0_i32_0 : i32
    scf.if %2 {
      %cst_30 = arith.constant 0.000000e+00 : f32
      %40 = vector.broadcast %cst_30 : f32 to vector<3x256xf32>
      %c0_31 = arith.constant 0 : index
      %c0_32 = arith.constant 0 : index
      %c0_33 = arith.constant 0 : index
      %41 = vector.load %arg4[%c0_31, %c0_32, %c0_33] : memref<1x3x256xf32, #tpu.memory_space<vmem>>, vector<1x3x256xf32>
      %42 = vector.shape_cast %41 : vector<1x3x256xf32> to vector<3x256xf32>
      %43 = vector.shape_cast %40 : vector<3x256xf32> to vector<1x3x256xf32>
      tpu.vector_store %arg4[%c0_31, %c0_32, %c0_33], %43 {strides = array<i32>} : memref<1x3x256xf32, #tpu.memory_space<vmem>>, vector<1x3x256xf32>,
    } else {
    }
    %c0 = arith.constant 0 : index
    %c0_1 = arith.constant 0 : index
    %c0_2 = arith.constant 0 : index
    %c0_3 = arith.constant 0 : index
    %3 = vector.load %arg2[%c0, %c0_1, %c0_2, %c0_3] : memref<1x2x1x256xf32, #tpu.memory_space<vmem>>, vector<1x1x1x256xf32>
    %4 = vector.shape_cast %3 : vector<1x1x1x256xf32> to vector<1x256xf32>
    %c0_4 = arith.constant 0 : index
    %c1 = arith.constant 1 : index
    %c0_5 = arith.constant 0 : index
    %c0_6 = arith.constant 0 : index
    %5 = vector.load %arg2[%c0_4, %c1, %c0_5, %c0_6] : memref<1x2x1x256xf32, #tpu.memory_space<vmem>>, vector<1x1x1x256xf32>
    %6 = vector.shape_cast %5 : vector<1x1x1x256xf32> to vector<1x256xf32>
    %7 = arith.subf %4, %6 : vector<1x256xf32>
    %8 = arith.negf %7 : vector<1x256xf32>
    %9 = math.exp %8 : vector<1x256xf32>
    %cst = arith.constant 1.000000e+00 : f32
    %10 = vector.broadcast %cst : f32 to vector<1x256xf32>
    %11 = arith.addf %10, %9 : vector<1x256xf32>
    %12 = arith.divf %10, %11 : vector<1x256xf32>
    %c0_7 = arith.constant 0 : index
    %c0_8 = arith.constant 0 : index
    %c0_9 = arith.constant 0 : index
    %13 = vector.load %arg3[%c0_7, %c0_8, %c0_9] : memref<1x1x256xf32, #tpu.memory_space<vmem>>, vector<1x1x256xf32>
    %14 = vector.shape_cast %13 : vector<1x1x256xf32> to vector<1x256xf32>
    %c0_10 = arith.constant 0 : index
    %c0_11 = arith.constant 0 : index
    %c0_12 = arith.constant 0 : index
    %15 = vector.load %arg4[%c0_10, %c0_11, %c0_12] : memref<1x3x256xf32, #tpu.memory_space<vmem>>, vector<1x1x256xf32>
    %16 = vector.shape_cast %15 : vector<1x1x256xf32> to vector<1x256xf32>
    %cst_13 = arith.constant dense<0.000000e+00> : vector<256xf32>
    %17 = vector.multi_reduction <add>, %12, %cst_13 [0] : vector<1x256xf32> to vector<256xf32>
    %18 = vector.shape_cast %17 : vector<256xf32> to vector<1x256xf32>
    %19 = arith.addf %16, %18 : vector<1x256xf32>
    %c0_14 = arith.constant 0 : index
    %c0_15 = arith.constant 0 : index
    %c0_16 = arith.constant 0 : index
    %20 = vector.load %arg4[%c0_14, %c0_15, %c0_16] : memref<1x3x256xf32, #tpu.memory_space<vmem>>, vector<1x1x256xf32>
    %21 = vector.shape_cast %20 : vector<1x1x256xf32> to vector<1x256xf32>
    %22 = vector.shape_cast %19 : vector<1x256xf32> to vector<1x1x256xf32>
    tpu.vector_store %arg4[%c0_14, %c0_15, %c0_16], %22 {strides = array<i32>} : memref<1x3x256xf32, #tpu.memory_space<vmem>>, vector<1x1x256xf32>,
    %c0_17 = arith.constant 0 : index
    %c1_18 = arith.constant 1 : index
    %c0_19 = arith.constant 0 : index
    %23 = vector.load %arg4[%c0_17, %c1_18, %c0_19] : memref<1x3x256xf32, #tpu.memory_space<vmem>>, vector<1x1x256xf32>
    %24 = vector.shape_cast %23 : vector<1x1x256xf32> to vector<1x256xf32>
    %cst_20 = arith.constant dense<0.000000e+00> : vector<256xf32>
    %25 = vector.multi_reduction <add>, %14, %cst_20 [0] : vector<1x256xf32> to vector<256xf32>
    %26 = vector.shape_cast %25 : vector<256xf32> to vector<1x256xf32>
    %27 = arith.addf %24, %26 : vector<1x256xf32>
    %c0_21 = arith.constant 0 : index
    %c1_22 = arith.constant 1 : index
    %c0_23 = arith.constant 0 : index
    %28 = vector.load %arg4[%c0_21, %c1_22, %c0_23] : memref<1x3x256xf32, #tpu.memory_space<vmem>>, vector<1x1x256xf32>
    %29 = vector.shape_cast %28 : vector<1x1x256xf32> to vector<1x256xf32>
    %30 = vector.shape_cast %27 : vector<1x256xf32> to vector<1x1x256xf32>
    tpu.vector_store %arg4[%c0_21, %c1_22, %c0_23], %30 {strides = array<i32>} : memref<1x3x256xf32, #tpu.memory_space<vmem>>, vector<1x1x256xf32>,
    %c0_24 = arith.constant 0 : index
    %c2 = arith.constant 2 : index
    %c0_25 = arith.constant 0 : index
    %31 = vector.load %arg4[%c0_24, %c2, %c0_25] : memref<1x3x256xf32, #tpu.memory_space<vmem>>, vector<1x1x256xf32>
    %32 = vector.shape_cast %31 : vector<1x1x256xf32> to vector<1x256xf32>
    %33 = arith.mulf %12, %14 : vector<1x256xf32>
    %cst_26 = arith.constant dense<0.000000e+00> : vector<256xf32>
    %34 = vector.multi_reduction <add>, %33, %cst_26 [0] : vector<1x256xf32> to vector<256xf32>
    %35 = vector.shape_cast %34 : vector<256xf32> to vector<1x256xf32>
    %36 = arith.addf %32, %35 : vector<1x256xf32>
    %c0_27 = arith.constant 0 : index
    %c2_28 = arith.constant 2 : index
    %c0_29 = arith.constant 0 : index
    %37 = vector.load %arg4[%c0_27, %c2_28, %c0_29] : memref<1x3x256xf32, #tpu.memory_space<vmem>>, vector<1x1x256xf32>
    %38 = vector.shape_cast %37 : vector<1x1x256xf32> to vector<1x256xf32>
    %39 = vector.shape_cast %36 : vector<1x256xf32> to vector<1x1x256xf32>
    tpu.vector_store %arg4[%c0_27, %c2_28, %c0_29], %39 {strides = array<i32>} : memref<1x3x256xf32, #tpu.memory_space<vmem>>, vector<1x1x256xf32>,
    return
  }
  func.func @transform_0(%arg0: i32, %arg1: i32) -> (i32, i32, i32, i32) {
    %c0_i32 = arith.constant 0 : i32
    %c0_i32_0 = arith.constant 0 : i32
    %c0_i32_1 = arith.constant 0 : i32
    return %arg0, %c0_i32, %arg1, %c0_i32_0 : i32, i32, i32, i32
  }
  func.func @transform_1(%arg0: i32, %arg1: i32) -> (i32, i32, i32) {
    %c0_i32 = arith.constant 0 : i32
    %c0_i32_0 = arith.constant 0 : i32
    return %arg0, %arg1, %c0_i32 : i32, i32, i32
  }
  func.func @transform_2(%arg0: i32, %arg1: i32) -> (i32, i32, i32) {
    %c0_i32 = arith.constant 0 : i32
    %c0_i32_0 = arith.constant 0 : i32
    %c0_i32_1 = arith.constant 0 : i32
    return %arg0, %c0_i32, %c0_i32_0 : i32, i32, i32
  }
}

</mosaic_0001>

<llo_original>
// kernel: iou_loss.1
$region0: #{iou_loss.1}
  #allocation0 [shape = 'u32[]', space=smem, size = 0x4, offset = 0x4, fixed_abs, tag = 'smem constant byte address 0x4 - core index']
  #allocation1 [shape = 'u32[144,128]{1,0:T(1,128)}', space=vmem, size = 0x12000, scoped, tag = 'internal scratch']
  %s0 = inlined_call_operand.vmem [shape: f32[2,2,1,256], index: 0, kind: input, shape index: {}]
  %s1 = inlined_call_operand.vmem [shape: f32[2,1,256], index: 1, kind: input, shape index: {}]
  %s2 = inlined_call_operand.vmem [shape: f32[2,3,256], index: 2, kind: output, shape index: {}]
  %s3 = sld [smem:[#allocation0]]
  $region45: #{iou_loss.1} parent=0
    _
  %s5 = ssub.s32 1, %s3
  %s6 = scalar_select 0, %s5, %s3
  loop: start=0, step=1, limit=4
  $region2: #{iou_loss.1} parent=0 // loop_pre_header
    _
  $region3: #{iou_loss.1} parent=0 // loop_header
    %s8 = sphi 0, %s12
    %p9 = scmp.ge.s32.totalorder %s8, 4
    %s15 = sphi 0, %s27
    %s16 = sphi 0, %s23
    %s17 = sphi 0, %s15
    %s18 = sphi 0, %s16
    %s19 = sphi 0, %s17
    %s20 = sphi 0, %s18
    %s32 = sphi 0, %s34
    %s35 = sphi 0, %s32
    %s36 = sphi 0, %s35
    %s52 = sphi 0, %s36
    %s60 = sphi 0, %s62
    %s63 = sphi 0, %s60
    %s64 = sphi 0, %s63
    %s80 = sphi 0, %s64
    %s86 = sphi 0, %s88
    %s89 = sphi 0, %s86
    %s90 = sphi 0, %s89
    %s106 = sphi 0, %s90
  $region4: #{iou_loss.1} parent=0 // loop_header_branch
    %11 = sbr.rel (%p9) target = $region8
  $region5: #{iou_loss.1} parent=0 // loop_body
    %s13 = ssub.s32 %s8, 1
    %s14 = ssub.s32 %s8, 2
    %s21 = sadd.s32 1, %s16
    %p22 = scmp.ge.s32.totalorder %s21, 1
    %s23 = scalar_select %p22, 0, %s21
    %s24 = sadd.s32 1, %s15
    %s25 = scalar_select %p22, %s24, %s15
    %p26 = scmp.ge.s32.totalorder %s25, 2
    %s27 = scalar_select %p26, 0, %s25
    %s28 = ssub.s32 %s15, %s27
    %s29 = ssub.s32 %s16, %s23
    %s30 = sor.u32 %s28, %s29
    %p31 = scmp.eq.s32.totalorder %s30, 0
    %s33 = sadd.s32 %s32, 1
    %s34 = scalar_select %p31, %s32, %s33
    %p37 = pneg %p31
    %p38 = scmp.eq.s32.totalorder %s8, 1
    %p39 = por %p37, %p38
    %p40 = scmp.ne.s32.totalorder %s32, %s35
    %p41 = scmp.eq.s32.totalorder %s8, 0
    %p42 = por %p40, %p41
    %p43 = scmp.ne.s32.totalorder %s32, %s35
    %p44 = scmp.eq.s32.totalorder %s13, 1
    %p45 = por %p43, %p44
    %p46 = scmp.ne.s32.totalorder %s35, %s36
    %p47 = scmp.eq.s32.totalorder %s13, 0
    %p48 = por %p46, %p47
    %p49 = scmp.ne.s32.totalorder %s35, %s36
    %p50 = scmp.eq.s32.totalorder %s14, 1
    %p51 = por %p49, %p50
    %p53 = scmp.ne.s32.totalorder %s36, %s52
    %p54 = scmp.eq.s32.totalorder %s14, 0
    %p55 = por %p53, %p54
    %s56 = ssub.s32 %s15, %s27
    %s57 = ssub.s32 %s16, %s23
    %s58 = sor.u32 %s56, %s57
    %p59 = scmp.eq.s32.totalorder %s58, 0
    %s61 = sadd.s32 %s60, 1
    %s62 = scalar_select %p59, %s60, %s61
    %p65 = pneg %p59
    %p66 = scmp.eq.s32.totalorder %s8, 1
    %p67 = por %p65, %p66
    %p68 = scmp.ne.s32.totalorder %s60, %s63
    %p69 = scmp.eq.s32.totalorder %s8, 0
    %p70 = por %p68, %p69
    %p71 = scmp.ne.s32.totalorder %s60, %s63
    %p72 = scmp.eq.s32.totalorder %s13, 1
    %p73 = por %p71, %p72
    %p74 = scmp.ne.s32.totalorder %s63, %s64
    %p75 = scmp.eq.s32.totalorder %s13, 0
    %p76 = por %p74, %p75
    %p77 = scmp.ne.s32.totalorder %s63, %s64
    %p78 = scmp.eq.s32.totalorder %s14, 1
    %p79 = por %p77, %p78
    %p81 = scmp.ne.s32.totalorder %s64, %s80
    %p82 = scmp.eq.s32.totalorder %s14, 0
    %p83 = por %p81, %p82
    %s84 = ssub.s32 %s15, %s27
    %p85 = scmp.eq.s32.totalorder %s84, 0
    %s87 = sadd.s32 %s86, 1
    %s88 = scalar_select %p85, %s86, %s87
    %p91 = pneg %p85
    %p92 = scmp.eq.s32.totalorder %s8, 1
    %p93 = por %p91, %p92
    %p94 = scmp.ne.s32.totalorder %s86, %s89
    %p95 = scmp.eq.s32.totalorder %s8, 0
    %p96 = por %p94, %p95
    %p97 = scmp.ne.s32.totalorder %s86, %s89
    %p98 = scmp.eq.s32.totalorder %s13, 1
    %p99 = por %p97, %p98
    %p100 = scmp.ne.s32.totalorder %s89, %s90
    %p101 = scmp.eq.s32.totalorder %s13, 0
    %p102 = por %p100, %p101
    %p103 = scmp.ne.s32.totalorder %s89, %s90
    %p104 = scmp.eq.s32.totalorder %s14, 1
    %p105 = por %p103, %p104
    %p107 = scmp.ne.s32.totalorder %s90, %s106
    %p108 = scmp.eq.s32.totalorder %s14, 0
    %p109 = por %p107, %p108
    %p110 = scmp.le.s32.totalorder 1, %s8
    %p111 = scmp.lt.s32.totalorder %s8, 3
    %p112 = pnand %p110, %p111
    %p113 = pneg %p112
    // Predicated region
    $region9: #{iou_loss.1} parent=5 // pred_check
      _
    $region10: #{iou_loss.1} parent=5 // pred_check_branch
      %115 = sbr.rel (%p112) target = $region12
    $region11: #{iou_loss.1} parent=5 // pred_region
      %s116 = ssub.s32 %s8, 1
    $region12: #{iou_loss.1} parent=5 // pred_fallthru
      _
    %p117 = scmp.lt.s32.totalorder %s8, 2
    // Predicated region
    $region13: #{iou_loss.1} parent=5 // pred_check
      %p118 = pneg %p117
    $region14: #{iou_loss.1} parent=5 // pred_check_branch
      %120 = sbr.rel (%p118) target = $region16
    $region15: #{iou_loss.1} parent=5 // pred_region
      // Predicated region
      $region17: #{iou_loss.1} parent=15 // pred_check
        %p121 = pneg %p42
      $region18: #{iou_loss.1} parent=15 // pred_check_branch
        %123 = sbr.rel (%p121) target = $region20
      $region19: #{iou_loss.1} parent=15 // pred_region
        %p124 = scmp.lt.s32.totalorder %s15, 1
        %s125 = scalar_select %p124, %s15, 1
        %p126 = scmp.lt.s32.totalorder %s16, 0
        %s127 = scalar_select %p126, %s16, 0
        %s128 = smul.addr %s127, 2
        %s129 = smul.addr %s125, 4
        %s130 = sadd.s32 %s128, %s129
        %s131 = scalar_lea.vmem %s0, %s130
      $region20: #{iou_loss.1} parent=15 // pred_fallthru
        _
      // Predicated region
      $region21: #{iou_loss.1} parent=15 // pred_check
        %p132 = pneg %p70
      $region22: #{iou_loss.1} parent=15 // pred_check_branch
        %134 = sbr.rel (%p132) target = $region24
      $region23: #{iou_loss.1} parent=15 // pred_region
        %p135 = scmp.lt.s32.totalorder %s15, 1
        %s136 = scalar_select %p135, %s15, 1
        %p137 = scmp.lt.s32.totalorder %s16, 0
        %s138 = scalar_select %p137, %s16, 0
        %s139 = smul.addr %s138, 2
        %s140 = smul.addr %s136, 2
        %s141 = sadd.s32 %s139, %s140
        %s142 = scalar_lea.vmem %s1, %s141
      $region24: #{iou_loss.1} parent=15 // pred_fallthru
        _
    $region16: #{iou_loss.1} parent=5 // pred_fallthru
      _
    %p143 = scmp.le.s32.totalorder 1, %s8
    %p144 = scmp.lt.s32.totalorder %s8, 3
    %p145 = pnand %p143, %p144
    %p146 = pneg %p145
    // Predicated region
    $region25: #{iou_loss.1} parent=5 // pred_check
      _
    $region26: #{iou_loss.1} parent=5 // pred_check_branch
      %148 = sbr.rel (%p145) target = $region28
    $region27: #{iou_loss.1} parent=5 // pred_region
      %s149 = ssub.s32 %s8, 1
      %p150 = scmp.lt.s32.totalorder %s17, 1
      %s151 = scalar_select %p150, %s17, 1
      %p152 = scmp.lt.s32.totalorder %s18, 0
      %s153 = scalar_select %p152, %s18, 0
      %s154 = smul.addr %s153, 2
      %s155 = smul.addr %s151, 4
      %s156 = sadd.s32 %s154, %s155
      %s157 = scalar_lea.vmem %s0, %s156
      %p158 = pneg %p48
      %p159 = pneg %p45
      %p160 = scmp.lt.s32.totalorder %s17, 1
      %s161 = scalar_select %p160, %s17, 1
      %p162 = scmp.lt.s32.totalorder %s18, 0
      %s163 = scalar_select %p162, %s18, 0
      %s164 = smul.addr %s163, 2
      %s165 = smul.addr %s161, 2
      %s166 = sadd.s32 %s164, %s165
      %s167 = scalar_lea.vmem %s1, %s166
      %p168 = pneg %p76
      %p169 = pneg %p73
      %p170 = pneg %p102
      %p171 = pneg %p99
      %p172 = scmp.lt.s32.totalorder %s17, 1
      %s173 = scalar_select %p172, %s17, 1
      %s174 = smul.addr %s173, 2
      %s175 = smul.addr %s174, 4
      %s176 = scalar_lea.vmem %s2, %s175
      %p177 = scmp.lt.s32.totalorder %s17, 1
      %s178 = scalar_select %p177, %s17, 1
      %p179 = scmp.lt.s32.totalorder %s18, 0
      %s180 = scalar_select %p179, %s18, 0
      %s181 = smul.addr %s180, 2
      %s182 = smul.addr %s178, 4
      %s183 = sadd.s32 %s181, %s182
      %s184 = scalar_lea.vmem %s0, %s183
      %p185 = scmp.lt.s32.totalorder %s17, 1
      %s186 = scalar_select %p185, %s17, 1
      %p187 = scmp.lt.s32.totalorder %s18, 0
      %s188 = scalar_select %p187, %s18, 0
      %s189 = smul.addr %s188, 2
      %s190 = smul.addr %s186, 2
      %s191 = sadd.s32 %s189, %s190
      %s192 = scalar_lea.vmem %s1, %s191
      %p193 = scmp.lt.s32.totalorder %s17, 1
      %s194 = scalar_select %p193, %s17, 1
      %s195 = smul.addr %s194, 2
      %s196 = smul.addr %s195, 4
      %s197 = scalar_lea.vmem %s2, %s196
      %p198 = scmp.eq.s32.totalorder %s18, 0
      // Predicated region
      $region29: #{iou_loss.1} parent=27 // pred_check
        %p199 = pneg %p198
      $region30: #{iou_loss.1} parent=27 // pred_check_branch
        %201 = sbr.rel (%p199) target = $region32
      $region31: #{iou_loss.1} parent=27 // pred_region
        %202 = vst [vmem:[%s197] sm:$0x77] 0.0
      $region32: #{iou_loss.1} parent=27 // pred_fallthru
        _
      %v203 = vld [vmem:[%s184] sm:$0x3]
      %s204 = scalar_lea.vmem %s184, 2
      %v205 = vld [vmem:[%s204] sm:$0x3]
      %v206 = vsub.f32 %v203, %v205
      %v207 = vxor.u32 %v206, 2147483648
      %v208 = vmul.f32 %v207, 1.442695
      %v209 = vpow.pop %v208
      %v210 = vadd.f32 %v209, 1.0
      %v211 = vrcp.pop %v210
      %v212 = vmul.f32 1.0, %v211
      %v213 = vld [vmem:[%s192] sm:$0x3]
      %v214 = vld [vmem:[%s197] ss:$4 sm:$0x3]
      %v215 = vadd.f32 %v212, 0.0
      %v216 = vadd.f32 %v214, %v215
      %v217 = vlaneseq
      %vm218 = vcmp.ge.s32.totalorder %v217, 0
      %vm219 = vcmp.lt.s32.totalorder %v217, 256
      %vm220 = vmand %vm218, %vm219
      %221 = vst.msk [vmem:[%s197] ss:$4 sm:$0x3] %vm220, %v216
      %s222 = scalar_lea.vmem %s197, 1
      %v223 = vld [vmem:[%s222] ss:$4 sm:$0x3]
      %v224 = vadd.f32 %v213, 0.0
      %v225 = vadd.f32 %v223, %v224
      %226 = vst.msk [vmem:[%s222] ss:$4 sm:$0x3] %vm220, %v225
      %s227 = scalar_lea.vmem %s197, 2
      %v228 = vld [vmem:[%s227] ss:$4 sm:$0x3]
      %v229 = vmul.f32 %v212, %v213
      %v230 = vadd.f32 %v229, 0.0
      %v231 = vadd.f32 %v228, %v230
      %232 = vst.msk [vmem:[%s227] ss:$4 sm:$0x3] %vm220, %v231
      %p233 = scmp.lt.s32.totalorder %s17, 1
      %s234 = scalar_select %p233, %s17, 1
      %s235 = smul.addr %s234, 2
      %s236 = smul.addr %s235, 4
      %s237 = scalar_lea.vmem %s2, %s236
      // Predicated region
      $region33: #{iou_loss.1} parent=27 // pred_check
        %p238 = pneg %p99
      $region34: #{iou_loss.1} parent=27 // pred_check_branch
        %240 = sbr.rel (%p238) target = $region36
      $region35: #{iou_loss.1} parent=27 // pred_region
        _
      $region36: #{iou_loss.1} parent=27 // pred_fallthru
        _
    $region28: #{iou_loss.1} parent=5 // pred_fallthru
      _
    %p241 = scmp.le.s32.totalorder 2, %s8
    // Predicated region
    $region37: #{iou_loss.1} parent=5 // pred_check
      %p242 = pneg %p241
    $region38: #{iou_loss.1} parent=5 // pred_check_branch
      %244 = sbr.rel (%p242) target = $region40
    $region39: #{iou_loss.1} parent=5 // pred_region
      %s245 = ssub.s32 %s8, 2
      // Predicated region
      $region41: #{iou_loss.1} parent=39 // pred_check
        %p246 = pneg %p105
      $region42: #{iou_loss.1} parent=39 // pred_check_branch
        %248 = sbr.rel (%p246) target = $region44
      $region43: #{iou_loss.1} parent=39 // pred_region
        %p249 = scmp.lt.s32.totalorder %s19, 1
        %s250 = scalar_select %p249, %s19, 1
        %s251 = smul.addr %s250, 2
        %s252 = smul.addr %s251, 4
        %s253 = scalar_lea.vmem %s2, %s252
      $region44: #{iou_loss.1} parent=39 // pred_fallthru
        _
    $region40: #{iou_loss.1} parent=5 // pred_fallthru
      _
  $region6: #{iou_loss.1} parent=0 // loop_footer
    %s12 = sadd.s32 1, %s8
  $region7: #{iou_loss.1} parent=0 // loop_footer_branch
    %7 = sbr.rel target = $region3
  $region8: #{iou_loss.1} parent=0 // loop_exit
    _

</llo_original>
